<compile_context>
chip_gen: v7x
topology: tpu7x:2x2x1
jax: 0.10.0
libtpu: 0.0.40
codegen_flags: <defaults>
</compile_context>

<pallas_src>
import functools

import jax
import jax.numpy as jnp
from jax.experimental import pallas as pl
from jax.experimental.pallas import tpu as pltpu


# ----------------------------------------------------------------------------
# Fused Pallas kernel: embedding gather + num_layers LSTM cells for one step t
# ----------------------------------------------------------------------------
def encoder_kernel(tok_ref, emb_ref, *rest, num_layers):
    """One grid step = one time step of the multi-layer LSTM.

    tok_ref : (seq_len, B) int32 token ids in SMEM (scalar prefetch)
    emb_ref : (vocab, E)   embedding table, VMEM resident
    rest    : w_cat_0, b_0, ..., w_cat_{L-1}, b_{L-1}, h_out, c_out
              w_cat_l : (in_l + H, 4H)   stacked [W_ih^T ; W_hh^T]
              b_l     : (1, 4H)          merged b_ih + b_hh
              h_out, c_out : (L, B, H)   also serve as the recurrent state
    """
    ws = rest[: 2 * num_layers]
    h_ref, c_ref = rest[2 * num_layers], rest[2 * num_layers + 1]

    t = pl.program_id(0)
    L, B, H = h_ref.shape

    # PyTorch nn.LSTM default zero initial state.
    @pl.when(t == 0)
    def _():
        h_ref[...] = jnp.zeros_like(h_ref)
        c_ref[...] = jnp.zeros_like(c_ref)

    # ---- embedding lookup for this time step (B rows gathered from VMEM) ----
    # TODO(synk): nn.Dropout on the embedding is identity in eval mode;
    #             training-mode stochastic dropout not implemented.
    rows = [emb_ref[pl.ds(tok_ref[t, b], 1), :] for b in range(B)]  # B x (1, E)
    layer_in = jnp.concatenate(rows, axis=0)                        # (B, E)

    # ---- unrolled layer loop (state carried in the output refs) ----
    for l in range(num_layers):
        w = ws[2 * l][...]        # (in_l + H, 4H)
        b = ws[2 * l + 1][...]    # (1, 4H)
        h_prev = h_ref[l]         # (B, H)
        c_prev = c_ref[l]         # (B, H)

        xh = jnp.concatenate([layer_in, h_prev], axis=-1)           # (B, in_l+H)
        gates = jnp.dot(xh, w, preferred_element_type=jnp.float32) + b  # (B, 4H)

        # Full-width activations on the lane-dense (B, 4H) tile, then slice.
        # PyTorch gate order: i, f, g, o.
        sig = jax.nn.sigmoid(gates)
        th = jnp.tanh(gates)
        i_g = sig[:, 0 * H:1 * H]
        f_g = sig[:, 1 * H:2 * H]
        g_g = th[:, 2 * H:3 * H]
        o_g = sig[:, 3 * H:4 * H]

        c_new = f_g * c_prev + i_g * g_g
        h_new = o_g * jnp.tanh(c_new)

        h_ref[l] = h_new.astype(h_ref.dtype)
        c_ref[l] = c_new.astype(c_ref.dtype)
        # TODO(synk): inter-layer LSTM dropout is identity in eval mode.
        layer_in = h_new


# ----------------------------------------------------------------------------
# Wrapper: one pallas_call for the whole sequence
# ----------------------------------------------------------------------------
def encoder_forward(params, x_tokens):
    """
    x_tokens: (seq_len, batch) int32 token ids
    returns:  hidden, cell  each (num_layers, batch, hidden_size) float32
    """
    seq_len, B = x_tokens.shape
    num_layers = len(params["w_cat"])
    H = params["w_cat"][0].shape[1] // 4
    E = params["embedding"].shape[1]

    weight_args = []
    in_specs = [pl.BlockSpec(params["embedding"].shape, lambda t, tok: (0, 0))]
    for l in range(num_layers):
        w = params["w_cat"][l]
        b = params["b_lstm"][l]
        weight_args += [w, b]
        # Constant index maps -> weights stay VMEM-resident across time steps.
        in_specs += [pl.BlockSpec(w.shape, lambda t, tok: (0, 0)),
                     pl.BlockSpec(b.shape, lambda t, tok: (0, 0))]

    out_specs = (
        pl.BlockSpec((num_layers, B, H), lambda t, tok: (0, 0, 0)),
        pl.BlockSpec((num_layers, B, H), lambda t, tok: (0, 0, 0)),
    )

    # Advisory cost estimate so XLA can schedule surrounding ops around us.
    flops, trans, bytes_acc = 0, 0, x_tokens.size * 4 + params["embedding"].size * 4
    for l in range(num_layers):
        in_dim = E if l == 0 else H
        flops += 2 * seq_len * B * (in_dim + H) * 4 * H
        trans += seq_len * B * 8 * H            # sigmoid + tanh full-width
        bytes_acc += params["w_cat"][l].size * 4 + params["b_lstm"][l].size * 4
    bytes_acc += 2 * num_layers * B * H * 4
    cost = pl.CostEstimate(flops=flops, transcendentals=trans,
                           bytes_accessed=bytes_acc)

    kernel = functools.partial(encoder_kernel, num_layers=num_layers)

    hidden, cell = pl.pallas_call(
        kernel,
        out_shape=(
            jax.ShapeDtypeStruct((num_layers, B, H), jnp.float32),  # hidden
            jax.ShapeDtypeStruct((num_layers, B, H), jnp.float32),  # cell
        ),
        grid_spec=pltpu.PrefetchScalarGridSpec(
            num_scalar_prefetch=1,          # x_tokens -> SMEM
            grid=(seq_len,),
            in_specs=in_specs,
            out_specs=out_specs,
        ),
        compiler_params=pltpu.CompilerParams(
            dimension_semantics=("arbitrary",)),   # sequential recurrence
        cost_estimate=cost,
    )(x_tokens, params["embedding"], *weight_args)
    return hidden, cell


# ----------------------------------------------------------------------------
# Pure-JAX reference (same math, same stacked weights) for validation
# ----------------------------------------------------------------------------
def encoder_reference(params, x_tokens):
    seq_len, B = x_tokens.shape
    L = len(params["w_cat"])
    H = params["w_cat"][0].shape[1] // 4
    h = jnp.zeros((L, B, H), jnp.float32)
    c = jnp.zeros((L, B, H), jnp.float32)
    for t in range(seq_len):
        x_in = params["embedding"][x_tokens[t]]
        for l in range(L):
            xh = jnp.concatenate([x_in, h[l]], axis=-1)
            gates = xh @ params["w_cat"][l] + params["b_lstm"][l]
            i_g = jax.nn.sigmoid(gates[:, 0 * H:1 * H])
            f_g = jax.nn.sigmoid(gates[:, 1 * H:2 * H])
            g_g = jnp.tanh(gates[:, 2 * H:3 * H])
            o_g = jax.nn.sigmoid(gates[:, 3 * H:4 * H])
            c_new = f_g * c[l] + i_g * g_g
            h_new = o_g * jnp.tanh(c_new)
            h = h.at[l].set(h_new)
            c = c.at[l].set(c_new)
            x_in = h_new
    return h, c


# ----------------------------------------------------------------------------
# Deterministic parameter construction (W_ih^T and W_hh^T pre-stacked)
# ----------------------------------------------------------------------------
def make_params(key, input_size, embedding_size, hidden_size, num_layers):
    keys = jax.random.split(key, 1 + 4 * num_layers)
    scale = 1.0 / jnp.sqrt(jnp.float32(hidden_size))

    params = {
        "embedding": jax.random.normal(
            keys[0], (input_size, embedding_size), jnp.float32) * 0.1
    }
    w_cat, b_lstm = [], []
    for l in range(num_layers):
        in_dim = embedding_size if l == 0 else hidden_size
        k0, k1, k2, k3 = keys[1 + 4 * l: 1 + 4 * (l + 1)]
        w_ih_t = jax.random.uniform(
            k0, (in_dim, 4 * hidden_size), jnp.float32, -scale, scale)
        w_hh_t = jax.random.uniform(
            k1, (hidden_size, 4 * hidden_size), jnp.float32, -scale, scale)
        b_ih = jax.random.uniform(
            k2, (1, 4 * hidden_size), jnp.float32, -scale, scale)
        b_hh = jax.random.uniform(
            k3, (1, 4 * hidden_size), jnp.float32, -scale, scale)
        w_cat.append(jnp.concatenate([w_ih_t, w_hh_t], axis=0))  # (in+H, 4H)
        b_lstm.append(b_ih + b_hh)                               # (1, 4H)
    params["w_cat"] = w_cat
    params["b_lstm"] = b_lstm
    return params


# ----------------------------------------------------------------------------
if __name__ == "__main__":
    input_size = 16        # source vocab
    embedding_size = 32
    hidden_size = 32       # 4H = 128 -> lane-dense gate tile
    num_layers = 2
    batch = 8
    seq_len = 8

    key = jax.random.PRNGKey(0)
    k_param, k_tok = jax.random.split(key, 2)

    params = make_params(k_param, input_size, embedding_size, hidden_size,
                         num_layers)
    x_tokens = jax.random.randint(k_tok, (seq_len, batch), 0, input_size,
                                  jnp.int32)

    hidden, cell = encoder_forward(params, x_tokens)
    jax.block_until_ready((hidden, cell))

    h_ref, c_ref = encoder_reference(params, x_tokens)
    assert hidden.shape == (num_layers, batch, hidden_size)
    assert cell.shape == (num_layers, batch, hidden_size)
    assert jnp.allclose(hidden, h_ref, atol=1e-5, rtol=1e-5)
    assert jnp.allclose(cell, c_ref, atol=1e-5, rtol=1e-5)

    print("KERNEL_OK")
</pallas_src>

<mosaic_0001>
module attributes {stable_mosaic.version = 11 : i64} {
  func.func @encoder_kernel(%arg0: i32, %arg1: memref<8x8xi32, #tpu.memory_space<smem>>, %arg2: memref<16x32xf32, #tpu.memory_space<vmem>>, %arg3: memref<64x128xf32, #tpu.memory_space<vmem>>, %arg4: memref<1x128xf32, #tpu.memory_space<vmem>>, %arg5: memref<64x128xf32, #tpu.memory_space<vmem>>, %arg6: memref<1x128xf32, #tpu.memory_space<vmem>>, %arg7: memref<2x8x32xf32, #tpu.memory_space<vmem>>, %arg8: memref<2x8x32xf32, #tpu.memory_space<vmem>>) attributes {dimension_semantics = [#tpu.dimension_semantics<arbitrary>], iteration_bounds = array<i64: 8>, scalar_prefetch = 1 : i64, scratch_operands = 0 : i64, tpu.core_type = #tpu.core_type<tc>, window_params = [{pipeline_mode = #tpu.pipeline_mode<synchronous>, transform_indices = @transform_0, window_bounds = array<i64: 16, 32>}, {pipeline_mode = #tpu.pipeline_mode<synchronous>, transform_indices = @transform_1, window_bounds = array<i64: 64, 128>}, {pipeline_mode = #tpu.pipeline_mode<synchronous>, transform_indices = @transform_2, window_bounds = array<i64: 1, 128>}, {pipeline_mode = #tpu.pipeline_mode<synchronous>, transform_indices = @transform_3, window_bounds = array<i64: 64, 128>}, {pipeline_mode = #tpu.pipeline_mode<synchronous>, transform_indices = @transform_4, window_bounds = array<i64: 1, 128>}, {pipeline_mode = #tpu.pipeline_mode<synchronous>, transform_indices = @transform_5, window_bounds = array<i64: 2, 8, 32>}, {pipeline_mode = #tpu.pipeline_mode<synchronous>, transform_indices = @transform_6, window_bounds = array<i64: 2, 8, 32>}]} {
    %c0_i32 = arith.constant 0 : i32
    %0 = arith.cmpi eq, %arg0, %c0_i32 : i32
    %1 = arith.extui %0 : i1 to i32
    %c0_i32_0 = arith.constant 0 : i32
    %2 = arith.cmpi ne, %1, %c0_i32_0 : i32
    scf.if %2 {
      %cst_44 = arith.constant 0.000000e+00 : f32
      %98 = vector.broadcast %cst_44 : f32 to vector<2x8x32xf32>
      %c0_45 = arith.constant 0 : index
      %c0_46 = arith.constant 0 : index
      %c0_47 = arith.constant 0 : index
      %99 = vector.load %arg7[%c0_45, %c0_46, %c0_47] : memref<2x8x32xf32, #tpu.memory_space<vmem>>, vector<2x8x32xf32>
      tpu.vector_store %arg7[%c0_45, %c0_46, %c0_47], %98 {strides = array<i32>} : memref<2x8x32xf32, #tpu.memory_space<vmem>>, vector<2x8x32xf32>,
      %cst_48 = arith.constant 0.000000e+00 : f32
      %100 = vector.broadcast %cst_48 : f32 to vector<2x8x32xf32>
      %c0_49 = arith.constant 0 : index
      %c0_50 = arith.constant 0 : index
      %c0_51 = arith.constant 0 : index
      %101 = vector.load %arg8[%c0_49, %c0_50, %c0_51] : memref<2x8x32xf32, #tpu.memory_space<vmem>>, vector<2x8x32xf32>
      tpu.vector_store %arg8[%c0_49, %c0_50, %c0_51], %100 {strides = array<i32>} : memref<2x8x32xf32, #tpu.memory_space<vmem>>, vector<2x8x32xf32>,
    } else {
    }
    %3 = arith.index_cast %arg0 : i32 to index
    %c0 = arith.constant 0 : index
    %4 = memref.load %arg1[%3, %c0] : memref<8x8xi32, #tpu.memory_space<smem>>
    %5 = arith.index_cast %4 : i32 to index
    %c0_1 = arith.constant 0 : index
    %6 = vector.load %arg2[%5, %c0_1] : memref<16x32xf32, #tpu.memory_space<vmem>>, vector<1x32xf32>
    %7 = arith.index_cast %arg0 : i32 to index
    %c1 = arith.constant 1 : index
    %8 = memref.load %arg1[%7, %c1] : memref<8x8xi32, #tpu.memory_space<smem>>
    %9 = arith.index_cast %8 : i32 to index
    %c0_2 = arith.constant 0 : index
    %10 = vector.load %arg2[%9, %c0_2] : memref<16x32xf32, #tpu.memory_space<vmem>>, vector<1x32xf32>
    %11 = arith.index_cast %arg0 : i32 to index
    %c2 = arith.constant 2 : index
    %12 = memref.load %arg1[%11, %c2] : memref<8x8xi32, #tpu.memory_space<smem>>
    %13 = arith.index_cast %12 : i32 to index
    %c0_3 = arith.constant 0 : index
    %14 = vector.load %arg2[%13, %c0_3] : memref<16x32xf32, #tpu.memory_space<vmem>>, vector<1x32xf32>
    %15 = arith.index_cast %arg0 : i32 to index
    %c3 = arith.constant 3 : index
    %16 = memref.load %arg1[%15, %c3] : memref<8x8xi32, #tpu.memory_space<smem>>
    %17 = arith.index_cast %16 : i32 to index
    %c0_4 = arith.constant 0 : index
    %18 = vector.load %arg2[%17, %c0_4] : memref<16x32xf32, #tpu.memory_space<vmem>>, vector<1x32xf32>
    %19 = arith.index_cast %arg0 : i32 to index
    %c4 = arith.constant 4 : index
    %20 = memref.load %arg1[%19, %c4] : memref<8x8xi32, #tpu.memory_space<smem>>
    %21 = arith.index_cast %20 : i32 to index
    %c0_5 = arith.constant 0 : index
    %22 = vector.load %arg2[%21, %c0_5] : memref<16x32xf32, #tpu.memory_space<vmem>>, vector<1x32xf32>
    %23 = arith.index_cast %arg0 : i32 to index
    %c5 = arith.constant 5 : index
    %24 = memref.load %arg1[%23, %c5] : memref<8x8xi32, #tpu.memory_space<smem>>
    %25 = arith.index_cast %24 : i32 to index
    %c0_6 = arith.constant 0 : index
    %26 = vector.load %arg2[%25, %c0_6] : memref<16x32xf32, #tpu.memory_space<vmem>>, vector<1x32xf32>
    %27 = arith.index_cast %arg0 : i32 to index
    %c6 = arith.constant 6 : index
    %28 = memref.load %arg1[%27, %c6] : memref<8x8xi32, #tpu.memory_space<smem>>
    %29 = arith.index_cast %28 : i32 to index
    %c0_7 = arith.constant 0 : index
    %30 = vector.load %arg2[%29, %c0_7] : memref<16x32xf32, #tpu.memory_space<vmem>>, vector<1x32xf32>
    %31 = arith.index_cast %arg0 : i32 to index
    %c7 = arith.constant 7 : index
    %32 = memref.load %arg1[%31, %c7] : memref<8x8xi32, #tpu.memory_space<smem>>
    %33 = arith.index_cast %32 : i32 to index
    %c0_8 = arith.constant 0 : index
    %34 = vector.load %arg2[%33, %c0_8] : memref<16x32xf32, #tpu.memory_space<vmem>>, vector<1x32xf32>
    %35 = tpu.concatenate %6, %10, %14, %18, %22, %26, %30, %34 in 0 : vector<1x32xf32>, vector<1x32xf32>, vector<1x32xf32>, vector<1x32xf32>, vector<1x32xf32>, vector<1x32xf32>, vector<1x32xf32>, vector<1x32xf32> -> vector<8x32xf32>
    %c0_9 = arith.constant 0 : index
    %c0_10 = arith.constant 0 : index
    %36 = vector.load %arg3[%c0_9, %c0_10] : memref<64x128xf32, #tpu.memory_space<vmem>>, vector<64x128xf32>
    %c0_11 = arith.constant 0 : index
    %c0_12 = arith.constant 0 : index
    %37 = vector.load %arg4[%c0_11, %c0_12] : memref<1x128xf32, #tpu.memory_space<vmem>>, vector<1x128xf32>
    %c0_13 = arith.constant 0 : index
    %c0_14 = arith.constant 0 : index
    %c0_15 = arith.constant 0 : index
    %38 = vector.load %arg7[%c0_13, %c0_14, %c0_15] : memref<2x8x32xf32, #tpu.memory_space<vmem>>, vector<1x8x32xf32>
    %39 = vector.shape_cast %38 : vector<1x8x32xf32> to vector<8x32xf32>
    %c0_16 = arith.constant 0 : index
    %c0_17 = arith.constant 0 : index
    %c0_18 = arith.constant 0 : index
    %40 = vector.load %arg8[%c0_16, %c0_17, %c0_18] : memref<2x8x32xf32, #tpu.memory_space<vmem>>, vector<1x8x32xf32>
    %41 = vector.shape_cast %40 : vector<1x8x32xf32> to vector<8x32xf32>
    %42 = tpu.concatenate %35, %39 in 1 : vector<8x32xf32>, vector<8x32xf32> -> vector<8x64xf32>
    %cst = arith.constant dense<0.000000e+00> : vector<8x128xf32>
    %43 = tpu.matmul %42, %36, %cst {dimension_numbers = #tpu.dot_dimension_numbers<[1], [0], [0], [1], [0, 0, 1, 1], [], []>} : vector<8x64xf32>, vector<64x128xf32>, vector<8x128xf32> -> vector<8x128xf32>
    %44 = vector.broadcast %37 : vector<1x128xf32> to vector<8x128xf32>
    %45 = arith.addf %43, %44 : vector<8x128xf32>
    %46 = arith.negf %45 : vector<8x128xf32>
    %47 = math.exp %46 : vector<8x128xf32>
    %cst_19 = arith.constant 1.000000e+00 : f32
    %48 = vector.broadcast %cst_19 : f32 to vector<8x128xf32>
    %49 = arith.addf %48, %47 : vector<8x128xf32>
    %50 = arith.divf %48, %49 : vector<8x128xf32>
    %51 = math.tanh %45 : vector<8x128xf32>
    %52 = vector.extract_strided_slice %50 {offsets = [0, 0], sizes = [8, 32], strides = [1, 1]} : vector<8x128xf32> to vector<8x32xf32>
    %53 = vector.extract_strided_slice %50 {offsets = [0, 32], sizes = [8, 32], strides = [1, 1]} : vector<8x128xf32> to vector<8x32xf32>
    %54 = vector.extract_strided_slice %51 {offsets = [0, 64], sizes = [8, 32], strides = [1, 1]} : vector<8x128xf32> to vector<8x32xf32>
    %55 = vector.extract_strided_slice %50 {offsets = [0, 96], sizes = [8, 32], strides = [1, 1]} : vector<8x128xf32> to vector<8x32xf32>
    %56 = arith.mulf %53, %41 : vector<8x32xf32>
    %57 = arith.mulf %52, %54 : vector<8x32xf32>
    %58 = arith.addf %56, %57 : vector<8x32xf32>
    %59 = math.tanh %58 : vector<8x32xf32>
    %60 = arith.mulf %55, %59 : vector<8x32xf32>
    %c0_20 = arith.constant 0 : index
    %c0_21 = arith.constant 0 : index
    %c0_22 = arith.constant 0 : index
    %61 = vector.load %arg7[%c0_20, %c0_21, %c0_22] : memref<2x8x32xf32, #tpu.memory_space<vmem>>, vector<1x8x32xf32>
    %62 = vector.shape_cast %61 : vector<1x8x32xf32> to vector<8x32xf32>
    %63 = vector.shape_cast %60 : vector<8x32xf32> to vector<1x8x32xf32>
    tpu.vector_store %arg7[%c0_20, %c0_21, %c0_22], %63 {strides = array<i32>} : memref<2x8x32xf32, #tpu.memory_space<vmem>>, vector<1x8x32xf32>,
    %c0_23 = arith.constant 0 : index
    %c0_24 = arith.constant 0 : index
    %c0_25 = arith.constant 0 : index
    %64 = vector.load %arg8[%c0_23, %c0_24, %c0_25] : memref<2x8x32xf32, #tpu.memory_space<vmem>>, vector<1x8x32xf32>
    %65 = vector.shape_cast %64 : vector<1x8x32xf32> to vector<8x32xf32>
    %66 = vector.shape_cast %58 : vector<8x32xf32> to vector<1x8x32xf32>
    tpu.vector_store %arg8[%c0_23, %c0_24, %c0_25], %66 {strides = array<i32>} : memref<2x8x32xf32, #tpu.memory_space<vmem>>, vector<1x8x32xf32>,
    %c0_26 = arith.constant 0 : index
    %c0_27 = arith.constant 0 : index
    %67 = vector.load %arg5[%c0_26, %c0_27] : memref<64x128xf32, #tpu.memory_space<vmem>>, vector<64x128xf32>
    %c0_28 = arith.constant 0 : index
    %c0_29 = arith.constant 0 : index
    %68 = vector.load %arg6[%c0_28, %c0_29] : memref<1x128xf32, #tpu.memory_space<vmem>>, vector<1x128xf32>
    %c1_30 = arith.constant 1 : index
    %c0_31 = arith.constant 0 : index
    %c0_32 = arith.constant 0 : index
    %69 = vector.load %arg7[%c1_30, %c0_31, %c0_32] : memref<2x8x32xf32, #tpu.memory_space<vmem>>, vector<1x8x32xf32>
    %70 = vector.shape_cast %69 : vector<1x8x32xf32> to vector<8x32xf32>
    %c1_33 = arith.constant 1 : index
    %c0_34 = arith.constant 0 : index
    %c0_35 = arith.constant 0 : index
    %71 = vector.load %arg8[%c1_33, %c0_34, %c0_35] : memref<2x8x32xf32, #tpu.memory_space<vmem>>, vector<1x8x32xf32>
    %72 = vector.shape_cast %71 : vector<1x8x32xf32> to vector<8x32xf32>
    %73 = tpu.concatenate %60, %70 in 1 : vector<8x32xf32>, vector<8x32xf32> -> vector<8x64xf32>
    %cst_36 = arith.constant dense<0.000000e+00> : vector<8x128xf32>
    %74 = tpu.matmul %73, %67, %cst_36 {dimension_numbers = #tpu.dot_dimension_numbers<[1], [0], [0], [1], [0, 0, 1, 1], [], []>} : vector<8x64xf32>, vector<64x128xf32>, vector<8x128xf32> -> vector<8x128xf32>
    %75 = vector.broadcast %68 : vector<1x128xf32> to vector<8x128xf32>
    %76 = arith.addf %74, %75 : vector<8x128xf32>
    %77 = arith.negf %76 : vector<8x128xf32>
    %78 = math.exp %77 : vector<8x128xf32>
    %cst_37 = arith.constant 1.000000e+00 : f32
    %79 = vector.broadcast %cst_37 : f32 to vector<8x128xf32>
    %80 = arith.addf %79, %78 : vector<8x128xf32>
    %81 = arith.divf %79, %80 : vector<8x128xf32>
    %82 = math.tanh %76 : vector<8x128xf32>
    %83 = vector.extract_strided_slice %81 {offsets = [0, 0], sizes = [8, 32], strides = [1, 1]} : vector<8x128xf32> to vector<8x32xf32>
    %84 = vector.extract_strided_slice %81 {offsets = [0, 32], sizes = [8, 32], strides = [1, 1]} : vector<8x128xf32> to vector<8x32xf32>
    %85 = vector.extract_strided_slice %82 {offsets = [0, 64], sizes = [8, 32], strides = [1, 1]} : vector<8x128xf32> to vector<8x32xf32>
    %86 = vector.extract_strided_slice %81 {offsets = [0, 96], sizes = [8, 32], strides = [1, 1]} : vector<8x128xf32> to vector<8x32xf32>
    %87 = arith.mulf %84, %72 : vector<8x32xf32>
    %88 = arith.mulf %83, %85 : vector<8x32xf32>
    %89 = arith.addf %87, %88 : vector<8x32xf32>
    %90 = math.tanh %89 : vector<8x32xf32>
    %91 = arith.mulf %86, %90 : vector<8x32xf32>
    %c1_38 = arith.constant 1 : index
    %c0_39 = arith.constant 0 : index
    %c0_40 = arith.constant 0 : index
    %92 = vector.load %arg7[%c1_38, %c0_39, %c0_40] : memref<2x8x32xf32, #tpu.memory_space<vmem>>, vector<1x8x32xf32>
    %93 = vector.shape_cast %92 : vector<1x8x32xf32> to vector<8x32xf32>
    %94 = vector.shape_cast %91 : vector<8x32xf32> to vector<1x8x32xf32>
    tpu.vector_store %arg7[%c1_38, %c0_39, %c0_40], %94 {strides = array<i32>} : memref<2x8x32xf32, #tpu.memory_space<vmem>>, vector<1x8x32xf32>,
    %c1_41 = arith.constant 1 : index
    %c0_42 = arith.constant 0 : index
    %c0_43 = arith.constant 0 : index
    %95 = vector.load %arg8[%c1_41, %c0_42, %c0_43] : memref<2x8x32xf32, #tpu.memory_space<vmem>>, vector<1x8x32xf32>
    %96 = vector.shape_cast %95 : vector<1x8x32xf32> to vector<8x32xf32>
    %97 = vector.shape_cast %89 : vector<8x32xf32> to vector<1x8x32xf32>
    tpu.vector_store %arg8[%c1_41, %c0_42, %c0_43], %97 {strides = array<i32>} : memref<2x8x32xf32, #tpu.memory_space<vmem>>, vector<1x8x32xf32>,
    return
  }
  func.func @transform_0(%arg0: i32, %arg1: memref<8x8xi32, #tpu.memory_space<smem>>) -> (i32, i32) {
    %c0_i32 = arith.constant 0 : i32
    %c0_i32_0 = arith.constant 0 : i32
    %c0_i32_1 = arith.constant 0 : i32
    return %c0_i32, %c0_i32_0 : i32, i32
  }
  func.func @transform_1(%arg0: i32, %arg1: memref<8x8xi32, #tpu.memory_space<smem>>) -> (i32, i32) {
    %c0_i32 = arith.constant 0 : i32
    %c0_i32_0 = arith.constant 0 : i32
    %c0_i32_1 = arith.constant 0 : i32
    return %c0_i32, %c0_i32_0 : i32, i32
  }
  func.func @transform_2(%arg0: i32, %arg1: memref<8x8xi32, #tpu.memory_space<smem>>) -> (i32, i32) {
    %c0_i32 = arith.constant 0 : i32
    %c0_i32_0 = arith.constant 0 : i32
    %c0_i32_1 = arith.constant 0 : i32
    return %c0_i32, %c0_i32_0 : i32, i32
  }
  func.func @transform_3(%arg0: i32, %arg1: memref<8x8xi32, #tpu.memory_space<smem>>) -> (i32, i32) {
    %c0_i32 = arith.constant 0 : i32
    %c0_i32_0 = arith.constant 0 : i32
    %c0_i32_1 = arith.constant 0 : i32
    return %c0_i32, %c0_i32_0 : i32, i32
  }
  func.func @transform_4(%arg0: i32, %arg1: memref<8x8xi32, #tpu.memory_space<smem>>) -> (i32, i32) {
    %c0_i32 = arith.constant 0 : i32
    %c0_i32_0 = arith.constant 0 : i32
    %c0_i32_1 = arith.constant 0 : i32
    return %c0_i32, %c0_i32_0 : i32, i32
  }
  func.func @transform_5(%arg0: i32, %arg1: memref<8x8xi32, #tpu.memory_space<smem>>) -> (i32, i32, i32) {
    %c0_i32 = arith.constant 0 : i32
    %c0_i32_0 = arith.constant 0 : i32
    %c0_i32_1 = arith.constant 0 : i32
    %c0_i32_2 = arith.constant 0 : i32
    return %c0_i32, %c0_i32_0, %c0_i32_1 : i32, i32, i32
  }
  func.func @transform_6(%arg0: i32, %arg1: memref<8x8xi32, #tpu.memory_space<smem>>) -> (i32, i32, i32) {
    %c0_i32 = arith.constant 0 : i32
    %c0_i32_0 = arith.constant 0 : i32
    %c0_i32_1 = arith.constant 0 : i32
    %c0_i32_2 = arith.constant 0 : i32
    return %c0_i32, %c0_i32_0, %c0_i32_1 : i32, i32, i32
  }
}

</mosaic_0001>

<llo_original>
// kernel: tpu_custom_call.1
$region0: #{tpu_custom_call.1}
  #allocation0 [shape = 'u32[]', space=smem, size = 0x4, offset = 0x4, fixed_abs, tag = 'smem constant byte address 0x4 - core index']
  #allocation1 [shape = 'u32[144,128]{1,0:T(1,128)}', space=vmem, size = 0x12000, scoped, tag = 'internal scratch']
  #allocation2 [shape = 's32[1]{0}', space=sflag, size = 0x4, scoped, tag = 'scoped memory for tpu_custom_call.1']
  #allocation3 [shape = 'u8[4096]{0}', space=smem, size = 0x1000, scoped, tag = 'prefetched SMEM operand 0']
  %s0 = inlined_call_operand.hbm [shape: s32[8,8], index: 0, kind: input, shape index: {}]
  %s1 = inlined_call_operand.hbm [shape: f32[16,32], index: 1, kind: input, shape index: {}]
  %s2 = inlined_call_operand.hbm [shape: f32[64,128], index: 2, kind: input, shape index: {}]
  %s3 = inlined_call_operand.vmem [shape: f32[1,128], index: 3, kind: input, shape index: {}]
  %s4 = inlined_call_operand.hbm [shape: f32[64,128], index: 4, kind: input, shape index: {}]
  %s5 = inlined_call_operand.vmem [shape: f32[1,128], index: 5, kind: input, shape index: {}]
  %s6 = inlined_call_operand.hbm [shape: f32[2,8,32], index: 6, kind: output, shape index: {0}]
  %s7 = inlined_call_operand.hbm [shape: f32[2,8,32], index: 7, kind: output, shape index: {1}]
  %8 = xla_tuple %s6, %s7
  %s9 = sld [smem:[#allocation0]]
  $region77: #{tpu_custom_call.1} parent=0
    _
  %s11 = ssub.s32 1, %s9
  %s12 = scalar_select 0, %s11, %s9
  %14 = dma.hbm_to_smem %s0, 128, [#allocation3], [#allocation2]
  %15 = dma.done [#allocation2], 128
  %16 = sfence
  $region1: #{tpu_custom_call.1} parent=0
    #allocation4 [shape = 'u8[8192]{0}', space=vmem, size = 0x2000, scoped, tag = 'input window, operand 1, single buffered']
    #allocation5 [shape = 's32[2]{0}', space=sflag, size = 0x8, scoped, tag = 'scoped memory for tpu_custom_call.1']
    #allocation6 [shape = 's32[2]{0}', space=sflag, size = 0x8, scoped, tag = 'scoped memory for tpu_custom_call.1']
    #allocation7 [shape = 'u8[32768]{0}', space=vmem, size = 0x8000, scoped, tag = 'input window, operand 2, single buffered']
    #allocation8 [shape = 's32[1]{0}', space=sflag, size = 0x4, scoped, tag = 'scoped memory for tpu_custom_call.1']
    #allocation9 [shape = 'u8[32768]{0}', space=vmem, size = 0x8000, scoped, tag = 'input window, operand 4, single buffered']
    #allocation10 [shape = 'u8[8192]{0}', space=vmem, size = 0x2000, scoped, tag = 'output window, operand 0, single buffered']
    #allocation11 [shape = 'u8[8192]{0}', space=vmem, size = 0x2000, scoped, tag = 'output window, operand 1, single buffered']
    #allocation12 [shape = 's32[1]{0}', space=sflag, size = 0x4, scoped, tag = 'scoped memory for tpu_custom_call.1']
    %17 = vsyncpa [#allocation5], 0
    %18 = vsyncpa [#allocation8], 0
    %19 = vsyncpa [#allocation6], 0
    %20 = vsyncpa [#allocation12], 0
    loop: start=0, step=1, limit=10
    $region2: #{tpu_custom_call.1} parent=1 // loop_pre_header
      _
    $region3: #{tpu_custom_call.1} parent=1 // loop_header
      %s22 = sphi 0, %s26
      %p23 = scmp.ge.s32.totalorder %s22, 10
      %s30 = sphi 0, %s30
      %s32 = sphi 0, %s30
      %s33 = sphi 0, %s32
      %s47 = sphi 0, %s33
      %s51 = sphi 0, %s51
      %s53 = sphi 0, %s51
      %s54 = sphi 0, %s53
      %s68 = sphi 0, %s54
      %s72 = sphi 0, %s72
      %s74 = sphi 0, %s72
      %s75 = sphi 0, %s74
      %s89 = sphi 0, %s75
      %s93 = sphi 0, %s93
      %s95 = sphi 0, %s93
      %s96 = sphi 0, %s95
      %s110 = sphi 0, %s96
      %s114 = sphi 0, %s114
      %s116 = sphi 0, %s114
      %s117 = sphi 0, %s116
      %s131 = sphi 0, %s117
      %s135 = sphi 0, %s135
      %s137 = sphi 0, %s135
      %s138 = sphi 0, %s137
      %s152 = sphi 0, %s138
      %s156 = sphi 0, %s156
      %s158 = sphi 0, %s156
      %s159 = sphi 0, %s158
      %s173 = sphi 0, %s159
    $region4: #{tpu_custom_call.1} parent=1 // loop_header_branch
      %25 = sbr.rel (%p23) target = $region8
    $region5: #{tpu_custom_call.1} parent=1 // loop_body
      %s27 = ssub.s32 %s22, 1
      %s28 = ssub.s32 %s22, 2
      %s29 = sadd.s32 %s22, 1
      %s31 = sadd.s32 %s30, 1
      %p34 = scmp.eq.s32.totalorder %s22, 7
      %p35 = scmp.ne.s32.totalorder %s30, %s32
      %p36 = scmp.eq.s32.totalorder %s22, 0
      %p37 = por %p35, %p36
      %p38 = scmp.ne.s32.totalorder %s30, %s32
      %p39 = scmp.eq.s32.totalorder %s27, 7
      %p40 = por %p38, %p39
      %p41 = scmp.ne.s32.totalorder %s32, %s33
      %p42 = scmp.eq.s32.totalorder %s27, 0
      %p43 = por %p41, %p42
      %p44 = scmp.ne.s32.totalorder %s32, %s33
      %p45 = scmp.eq.s32.totalorder %s28, 7
      %p46 = por %p44, %p45
      %p48 = scmp.ne.s32.totalorder %s33, %s47
      %p49 = scmp.eq.s32.totalorder %s28, 0
      %p50 = por %p48, %p49
      %s52 = sadd.s32 %s51, 1
      %p55 = scmp.eq.s32.totalorder %s22, 7
      %p56 = scmp.ne.s32.totalorder %s51, %s53
      %p57 = scmp.eq.s32.totalorder %s22, 0
      %p58 = por %p56, %p57
      %p59 = scmp.ne.s32.totalorder %s51, %s53
      %p60 = scmp.eq.s32.totalorder %s27, 7
      %p61 = por %p59, %p60
      %p62 = scmp.ne.s32.totalorder %s53, %s54
      %p63 = scmp.eq.s32.totalorder %s27, 0
      %p64 = por %p62, %p63
      %p65 = scmp.ne.s32.totalorder %s53, %s54
      %p66 = scmp.eq.s32.totalorder %s28, 7
      %p67 = por %p65, %p66
      %p69 = scmp.ne.s32.totalorder %s54, %s68
      %p70 = scmp.eq.s32.totalorder %s28, 0
      %p71 = por %p69, %p70
      %s73 = sadd.s32 %s72, 1
      %p76 = scmp.eq.s32.totalorder %s22, 7
      %p77 = scmp.ne.s32.totalorder %s72, %s74
      %p78 = scmp.eq.s32.totalorder %s22, 0
      %p79 = por %p77, %p78
      %p80 = scmp.ne.s32.totalorder %s72, %s74
      %p81 = scmp.eq.s32.totalorder %s27, 7
      %p82 = por %p80, %p81
      %p83 = scmp.ne.s32.totalorder %s74, %s75
      %p84 = scmp.eq.s32.totalorder %s27, 0
      %p85 = por %p83, %p84
      %p86 = scmp.ne.s32.totalorder %s74, %s75
      %p87 = scmp.eq.s32.totalorder %s28, 7
      %p88 = por %p86, %p87
      %p90 = scmp.ne.s32.totalorder %s75, %s89
      %p91 = scmp.eq.s32.totalorder %s28, 0
      %p92 = por %p90, %p91
      %s94 = sadd.s32 %s93, 1
      %p97 = scmp.eq.s32.totalorder %s22, 7
      %p98 = scmp.ne.s32.totalorder %s93, %s95
      %p99 = scmp.eq.s32.totalorder %s22, 0
      %p100 = por %p98, %p99
      %p101 = scmp.ne.s32.totalorder %s93, %s95
      %p102 = scmp.eq.s32.totalorder %s27, 7
      %p103 = por %p101, %p102
      %p104 = scmp.ne.s32.totalorder %s95, %s96
      %p105 = scmp.eq.s32.totalorder %s27, 0
      %p106 = por %p104, %p105
      %p107 = scmp.ne.s32.totalorder %s95, %s96
      %p108 = scmp.eq.s32.totalorder %s28, 7
      %p109 = por %p107, %p108
      %p111 = scmp.ne.s32.totalorder %s96, %s110
      %p112 = scmp.eq.s32.totalorder %s28, 0
      %p113 = por %p111, %p112
      %s115 = sadd.s32 %s114, 1
      %p118 = scmp.eq.s32.totalorder %s22, 7
      %p119 = scmp.ne.s32.totalorder %s114, %s116
      %p120 = scmp.eq.s32.totalorder %s22, 0
      %p121 = por %p119, %p120
      %p122 = scmp.ne.s32.totalorder %s114, %s116
      %p123 = scmp.eq.s32.totalorder %s27, 7
      %p124 = por %p122, %p123
      %p125 = scmp.ne.s32.totalorder %s116, %s117
      %p126 = scmp.eq.s32.totalorder %s27, 0
      %p127 = por %p125, %p126
      %p128 = scmp.ne.s32.totalorder %s116, %s117
      %p129 = scmp.eq.s32.totalorder %s28, 7
      %p130 = por %p128, %p129
      %p132 = scmp.ne.s32.totalorder %s117, %s131
      %p133 = scmp.eq.s32.totalorder %s28, 0
      %p134 = por %p132, %p133
      %s136 = sadd.s32 %s135, 1
      %p139 = scmp.eq.s32.totalorder %s22, 7
      %p140 = scmp.ne.s32.totalorder %s135, %s137
      %p141 = scmp.eq.s32.totalorder %s22, 0
      %p142 = por %p140, %p141
      %p143 = scmp.ne.s32.totalorder %s135, %s137
      %p144 = scmp.eq.s32.totalorder %s27, 7
      %p145 = por %p143, %p144
      %p146 = scmp.ne.s32.totalorder %s137, %s138
      %p147 = scmp.eq.s32.totalorder %s27, 0
      %p148 = por %p146, %p147
      %p149 = scmp.ne.s32.totalorder %s137, %s138
      %p150 = scmp.eq.s32.totalorder %s28, 7
      %p151 = por %p149, %p150
      %p153 = scmp.ne.s32.totalorder %s138, %s152
      %p154 = scmp.eq.s32.totalorder %s28, 0
      %p155 = por %p153, %p154
      %s157 = sadd.s32 %s156, 1
      %p160 = scmp.eq.s32.totalorder %s22, 7
      %p161 = scmp.ne.s32.totalorder %s156, %s158
      %p162 = scmp.eq.s32.totalorder %s22, 0
      %p163 = por %p161, %p162
      %p164 = scmp.ne.s32.totalorder %s156, %s158
      %p165 = scmp.eq.s32.totalorder %s27, 7
      %p166 = por %p164, %p165
      %p167 = scmp.ne.s32.totalorder %s158, %s159
      %p168 = scmp.eq.s32.totalorder %s27, 0
      %p169 = por %p167, %p168
      %p170 = scmp.ne.s32.totalorder %s158, %s159
      %p171 = scmp.eq.s32.totalorder %s28, 7
      %p172 = por %p170, %p171
      %p174 = scmp.ne.s32.totalorder %s159, %s173
      %p175 = scmp.eq.s32.totalorder %s28, 0
      %p176 = por %p174, %p175
      %p177 = scmp.le.s32.totalorder 1, %s22
      %p178 = scmp.lt.s32.totalorder %s22, 9
      %p179 = pnand %p177, %p178
      %p180 = pneg %p179
      // Predicated region
      $region9: #{tpu_custom_call.1} parent=5 // pred_check
        _
      $region10: #{tpu_custom_call.1} parent=5 // pred_check_branch
        %182 = sbr.rel (%p179) target = $region12
      $region11: #{tpu_custom_call.1} parent=5 // pred_region
        %s183 = ssub.s32 %s22, 1
        // Predicated region
        $region13: #{tpu_custom_call.1} parent=11 // pred_check
          %p184 = pneg %p43
        $region14: #{tpu_custom_call.1} parent=11 // pred_check_branch
          %186 = sbr.rel (%p184) target = $region16
        $region15: #{tpu_custom_call.1} parent=11 // pred_region
          %s188 = ssub.s32 256, 256
          %189 = vsyncadd [#allocation5], %s188
          %s190 = sshll.u32 [#allocation4], 4
          %s191 = int_to_ptr.vmem [resolvable:$true] %s190
          %196 = dma.hbm_to_vmem [thread:$0]  %s1, 256, %s191, [#allocation5], 128, 128, 8
        $region16: #{tpu_custom_call.1} parent=11 // pred_fallthru
          _
        // Predicated region
        $region17: #{tpu_custom_call.1} parent=11 // pred_check
          %p197 = pneg %p64
        $region18: #{tpu_custom_call.1} parent=11 // pred_check_branch
          %199 = sbr.rel (%p197) target = $region20
        $region19: #{tpu_custom_call.1} parent=11 // pred_region
          %s201 = ssub.s32 1024, 1024
          %202 = vsyncadd [#allocation8], %s201
          %s203 = sshll.u32 [#allocation7], 4
          %s204 = int_to_ptr.vmem [resolvable:$true] %s203
          %209 = dma.hbm_to_vmem [thread:$0]  %s2, 1024, %s204, [#allocation8], 128, 128, 8
        $region20: #{tpu_custom_call.1} parent=11 // pred_fallthru
          _
        // Predicated region
        $region21: #{tpu_custom_call.1} parent=11 // pred_check
          %p210 = pneg %p85
        $region22: #{tpu_custom_call.1} parent=11 // pred_check_branch
          %212 = sbr.rel (%p210) target = $region24
        $region23: #{tpu_custom_call.1} parent=11 // pred_region
          _
        $region24: #{tpu_custom_call.1} parent=11 // pred_fallthru
          _
        // Predicated region
        $region25: #{tpu_custom_call.1} parent=11 // pred_check
          %p213 = pneg %p106
        $region26: #{tpu_custom_call.1} parent=11 // pred_check_branch
          %215 = sbr.rel (%p213) target = $region28
        $region27: #{tpu_custom_call.1} parent=11 // pred_region
          %s217 = ssub.s32 1024, 1024
          %218 = vsyncadd [#allocation8], %s217
          %s219 = sshll.u32 [#allocation9], 4
          %s220 = int_to_ptr.vmem [resolvable:$true] %s219
          %225 = dma.hbm_to_vmem [thread:$0]  %s4, 1024, %s220, [#allocation8], 128, 128, 8
        $region28: #{tpu_custom_call.1} parent=11 // pred_fallthru
          _
        // Predicated region
        $region29: #{tpu_custom_call.1} parent=11 // pred_check
          %p226 = pneg %p127
        $region30: #{tpu_custom_call.1} parent=11 // pred_check_branch
          %228 = sbr.rel (%p226) target = $region32
        $region31: #{tpu_custom_call.1} parent=11 // pred_region
          _
        $region32: #{tpu_custom_call.1} parent=11 // pred_fallthru
          _
      $region12: #{tpu_custom_call.1} parent=5 // pred_fallthru
        _
      %p229 = scmp.lt.s32.totalorder %s22, 8
      // Predicated region
      $region33: #{tpu_custom_call.1} parent=5 // pred_check
        %p230 = pneg %p229
      $region34: #{tpu_custom_call.1} parent=5 // pred_check_branch
        %232 = sbr.rel (%p230) target = $region36
      $region35: #{tpu_custom_call.1} parent=5 // pred_region
        _
      $region36: #{tpu_custom_call.1} parent=5 // pred_fallthru
        _
      %p233 = scmp.le.s32.totalorder 1, %s22
      %p234 = scmp.lt.s32.totalorder %s22, 9
      %p235 = pnand %p233, %p234
      %p236 = pneg %p235
      // Predicated region
      $region37: #{tpu_custom_call.1} parent=5 // pred_check
        _
      $region38: #{tpu_custom_call.1} parent=5 // pred_check_branch
        %238 = sbr.rel (%p235) target = $region40
      $region39: #{tpu_custom_call.1} parent=5 // pred_region
        %s239 = ssub.s32 %s22, 1
        // Predicated region
        $region41: #{tpu_custom_call.1} parent=39 // pred_check
          %p240 = pneg %p43
        $region42: #{tpu_custom_call.1} parent=39 // pred_check_branch
          %242 = sbr.rel (%p240) target = $region44
        $region43: #{tpu_custom_call.1} parent=39 // pred_region
          %243 = dma.done [#allocation5], 256
        $region44: #{tpu_custom_call.1} parent=39 // pred_fallthru
          _
        // Predicated region
        $region45: #{tpu_custom_call.1} parent=39 // pred_check
          %p244 = pneg %p64
        $region46: #{tpu_custom_call.1} parent=39 // pred_check_branch
          %246 = sbr.rel (%p244) target = $region48
        $region47: #{tpu_custom_call.1} parent=39 // pred_region
          %247 = dma.done [#allocation8], 1024
        $region48: #{tpu_custom_call.1} parent=39 // pred_fallthru
          _
        // Predicated region
        $region49: #{tpu_custom_call.1} parent=39 // pred_check
          %p248 = pneg %p106
        $region50: #{tpu_custom_call.1} parent=39 // pred_check_branch
          %250 = sbr.rel (%p248) target = $region52
        $region51: #{tpu_custom_call.1} parent=39 // pred_region
          %251 = dma.done [#allocation8], 1024
        $region52: #{tpu_custom_call.1} parent=39 // pred_fallthru
          _
        %p252 = pneg %p43
        %p253 = pneg %p40
        %p254 = pneg %p64
        %p255 = pneg %p61
        %p256 = pneg %p85
        %p257 = pneg %p82
        %p258 = pneg %p106
        %p259 = pneg %p103
        %p260 = pneg %p127
        %p261 = pneg %p124
        %p262 = pneg %p148
        %p263 = pneg %p145
        %p264 = pneg %p169
        %p265 = pneg %p166
        %p266 = scmp.eq.s32.totalorder %s27, 0
        // Predicated region
        $region53: #{tpu_custom_call.1} parent=39 // pred_check
          %p267 = pneg %p266
        $region54: #{tpu_custom_call.1} parent=39 // pred_check_branch
          %269 = sbr.rel (%p267) target = $region56
        $region55: #{tpu_custom_call.1} parent=39 // pred_region
          %vm270 = vcmask 261120
          %271 = vst.msk [vmem:[#allocation10] sm:$0xff] %vm270, 0.0
          %272 = vst.msk [vmem:[#allocation10 + $0x8] sm:$0xff] %vm270, 0.0
          %273 = vst.msk [vmem:[#allocation11] sm:$0xff] %vm270, 0.0
          %274 = vst.msk [vmem:[#allocation11 + $0x8] sm:$0xff] %vm270, 0.0
        $region56: #{tpu_custom_call.1} parent=39 // pred_fallthru
          _
        %s275 = smul.u32 %s27, 128
        %s276 = sld [smem:[#allocation3 + %s275]]
        %s277 = scalar_lea.vmem [#allocation4], %s276
        %v278 = vld [vmem:[%s277] sm:$0x1]
        %s279 = sadd.s32 %s275, 1
        %s280 = sld [smem:[#allocation3 + %s279]]
        %s281 = scalar_lea.vmem [#allocation4], %s280
        %v282 = vld [vmem:[%s281] sm:$0x1]
        %s283 = sadd.s32 %s275, 2
        %s284 = sld [smem:[#allocation3 + %s283]]
        %s285 = scalar_lea.vmem [#allocation4], %s284
        %v286 = vld [vmem:[%s285] sm:$0x1]
        %s287 = sadd.s32 %s275, 3
        %s288 = sld [smem:[#allocation3 + %s287]]
        %s289 = scalar_lea.vmem [#allocation4], %s288
        %v290 = vld [vmem:[%s289] sm:$0x1]
        %s291 = sadd.s32 %s275, 4
        %s292 = sld [smem:[#allocation3 + %s291]]
        %s293 = scalar_lea.vmem [#allocation4], %s292
        %v294 = vld [vmem:[%s293] sm:$0x1]
        %s295 = sadd.s32 %s275, 5
        %s296 = sld [smem:[#allocation3 + %s295]]
        %s297 = scalar_lea.vmem [#allocation4], %s296
        %v298 = vld [vmem:[%s297] sm:$0x1]
        %s299 = sadd.s32 %s275, 6
        %s300 = sld [smem:[#allocation3 + %s299]]
        %s301 = scalar_lea.vmem [#allocation4], %s300
        %v302 = vld [vmem:[%s301] sm:$0x1]
        %s303 = sadd.s32 %s275, 7
        %s304 = sld [smem:[#allocation3 + %s303]]
        %s305 = scalar_lea.vmem [#allocation4], %s304
        %v306 = vld [vmem:[%s305] sm:$0x1]
        %v308 = vrot.slane %v282, 7
        %v311 = vrot.slane %v286, 6
        %v314 = vrot.slane %v290, 5
        %v317 = vrot.slane %v294, 4
        %v320 = vrot.slane %v298, 3
        %v323 = vrot.slane %v302, 2
        %v326 = vrot.slane %v306, 1
        %vm328 = vcmask 1040384
        %v329 = vsel %vm328, %v278, %v308
        %vm330 = vcmask 1041408
        %v331 = vsel %vm330, %v329, %v311
        %vm332 = vcmask 1042432
        %v333 = vsel %vm332, %v331, %v314
        %vm334 = vcmask 1043456
        %v335 = vsel %vm334, %v333, %v317
        %vm336 = vcmask 1044480
        %v337 = vsel %vm336, %v335, %v320
        %vm338 = vcmask 1045504
        %v339 = vsel %vm338, %v337, %v323
        %vm340 = vcmask 1046528
        %v341 = vsel %vm340, %v339, %v326
        %v342 = vld [vmem:[#allocation7] sm:$0xff]
        %v343 = vld [vmem:[#allocation7 + $0x8] sm:$0xff]
        %v344 = vld [vmem:[#allocation7 + $0x10] sm:$0xff]
        %v345 = vld [vmem:[#allocation7 + $0x18] sm:$0xff]
        %v346 = vld [vmem:[#allocation7 + $0x20] sm:$0xff]
        %v347 = vld [vmem:[#allocation7 + $0x28] sm:$0xff]
        %v348 = vld [vmem:[#allocation7 + $0x30] sm:$0xff]
        %v349 = vld [vmem:[#allocation7 + $0x38] sm:$0xff]
        %v350 = vld [vmem:[%s3] sm:$0x1]
        %v351 = vld [vmem:[#allocation10] sm:$0xff]
        %v352 = vld [vmem:[#allocation11] sm:$0xff]
        %354 = vrot.lane.b32.xlu0 %v351, 32
        %v355 = vpop.permute.xlu0 %354
        %vm357 = vcmask 261120
        %v358 = vsel %vm357, %v341, %v355
        %v360 = vlaneseq
        %v361 = vshrl.u32 %v360, 7
        %v362 = vsub.s32 0, %v361
        %v363 = vrot.slane %v350, %v362
        %vm365 = vcmask 523264
        %v367 = vsel %vm365, %v358, 0
        %369 = vmatprep.subr.mxu0 0.0
        %370 = vmatpush1.msra.mxu0 %v342
        %371 = vmatprep.subr.mxu0 0.0
        %372 = vmatpush1.msra.mxu0 %v343
        %373 = vmatprep.subr.mxu0 0.0
        %374 = vmatpush1.msra.mxu0 %v344
        %375 = vmatprep.subr.mxu0 0.0
        %376 = vmatpush1.msra.mxu0 %v345
        %377 = vmatprep.subr.mxu0 0.0
        %378 = vmatpush1.msra.mxu0 %v346
        %379 = vmatprep.subr.mxu0 0.0
        %380 = vmatpush1.msra.mxu0 %v347
        %381 = vmatprep.subr.mxu0 0.0
        %382 = vmatpush1.msra.mxu0 %v348
        %383 = vmatprep.subr.mxu0 0.0
        %384 = vmatpush1.msra.mxu0 %v349
        %385 = vmatprep.subr.mxu0 0.0
        %386 = vmatpush1.msra.mxu0 0.0
        %387 = vmatprep.subr.mxu0 0.0
        %388 = vmatpush1.msra.mxu0 0.0
        %389 = vmatprep.subr.mxu0 0.0
        %390 = vmatpush1.msra.mxu0 0.0
        %391 = vmatprep.subr.mxu0 0.0
        %392 = vmatpush1.msra.mxu0 0.0
        %393 = vmatprep.subr.mxu0 0.0
        %394 = vmatpush1.msra.mxu0 0.0
        %395 = vmatprep.subr.mxu0 0.0
        %396 = vmatpush1.msra.mxu0 0.0
        %397 = vmatprep.subr.mxu0 0.0
        %398 = vmatpush1.msra.mxu0 0.0
        %399 = vmatprep.subr.mxu0 0.0
        %400 = vmatpush1.msra.mxu0 0.0
        %401 = vmatprep.subr.mxu0 0.0
        %402 = vmatpush1.msra.mxu0 0.0
        %403 = vmatprep.subr.mxu0 0.0
        %404 = vmatpush1.msra.mxu0 0.0
        %405 = vmatprep.subr.mxu0 0.0
        %406 = vmatpush1.msra.mxu0 0.0
        %407 = vmatprep.subr.mxu0 0.0
        %408 = vmatpush1.msra.mxu0 0.0
        %409 = vmatprep.subr.mxu0 0.0
        %410 = vmatpush1.msra.mxu0 0.0
        %411 = vmatprep.subr.mxu0 0.0
        %412 = vmatpush1.msra.mxu0 0.0
        %413 = vmatprep.subr.mxu0 0.0
        %414 = vmatpush1.msra.mxu0 0.0
        %415 = vmatprep.subr.mxu0 0.0
        %416 = vmatpush1.msra.mxu0 0.0
        %417 = vmatprep.subr.mxu0 0.0
        %418 = vmatpush1.msra.mxu0 0.0
        %419 = vmatprep.subr.mxu0 0.0
        %420 = vmatpush1.msra.mxu0 0.0
        %421 = vmatprep.subr.mxu0 0.0
        %422 = vmatpush1.msra.mxu0 0.0
        %423 = vmatprep.subr.mxu0 0.0
        %424 = vmatpush1.msra.mxu0 0.0
        %425 = vmatprep.subr.mxu0 0.0
        %426 = vmatpush1.msra.mxu0 0.0
        %427 = vmatprep.subr.mxu0 0.0
        %428 = vmatpush1.msra.mxu0 0.0
        %429 = vmatprep.subr.mxu0 0.0
        %430 = vmatpush1.msra.mxu0 0.0
        %431 = vmatprep.subr.mxu0 0.0
        %432 = vmatpush1.msra.mxu0 0.0
        %433 = vmatprep.mubr.f32.mxu0 0.0
        %434 = vmatmul.mubr.f32.gmra.mrb[0].mxu0 %v367
        %v435 = vpop.f32.mrb[0].mxu0
        %v436 = vadd.f32 %v363, %v435
        %v437 = vpop.f32.mrb[0].mxu0
        %438 = vdwg.mxu0
        %v439 = vxor.u32 %v436, 2147483648
        %v440 = vmul.f32 %v439, 1.442695
        %v441 = vpow.pop %v440
        %v442 = vadd.f32 %v441, 1.0
        %v443 = vrcp.pop %v442
        %v444 = vmul.f32 1.0, %v443
        %v445 = vtanh.pop %v436
        %447 = vrot.lane.b32.xlu0 %v352, 32
        %v448 = vpop.permute.xlu0 %447
        %v450 = vmul.f32 %v444, %v448
        %452 = vrot.lane.b32.xlu0 %v445, 64
        %v453 = vpop.permute.xlu0 %452
        %v455 = vmul.f32 %v444, %v453
        %457 = vrot.lane.b32.xlu0 %v455, 32
        %v458 = vpop.permute.xlu0 %457
        %v460 = vadd.f32 %v450, %v458
        %v461 = vtanh.pop %v460
        %463 = vrot.lane.b32.xlu0 %v461, 64
        %v464 = vpop.permute.xlu0 %463
        %v466 = vmul.f32 %v444, %v464
        %468 = vrot.lane.b32.xlu0 %v466, 32
        %v469 = vpop.permute.xlu0 %468
        %471 = vst.msk [vmem:[#allocation10] sm:$0xff] %vm357, %v469
        %473 = vrot.lane.b32.xlu0 %v460, 96
        %v474 = vpop.permute.xlu0 %473
        %476 = vst.msk [vmem:[#allocation11] sm:$0xff] %vm357, %v474
        %v477 = vld [vmem:[#allocation9] sm:$0xff]
        %v478 = vld [vmem:[#allocation9 + $0x8] sm:$0xff]
        %v479 = vld [vmem:[#allocation9 + $0x10] sm:$0xff]
        %v480 = vld [vmem:[#allocation9 + $0x18] sm:$0xff]
        %v481 = vld [vmem:[#allocation9 + $0x20] sm:$0xff]
        %v482 = vld [vmem:[#allocation9 + $0x28] sm:$0xff]
        %v483 = vld [vmem:[#allocation9 + $0x30] sm:$0xff]
        %v484 = vld [vmem:[#allocation9 + $0x38] sm:$0xff]
        %v485 = vld [vmem:[%s5] sm:$0x1]
        %s486 = scalar_lea.vmem [#allocation10], 8
        %v487 = vld [vmem:[%s486] sm:$0xff]
        %s488 = scalar_lea.vmem [#allocation11], 8
        %v489 = vld [vmem:[%s488] sm:$0xff]
        %491 = vrot.lane.b32.xlu0 %v487, 32
        %v492 = vpop.permute.xlu0 %491
        %v494 = vsel %vm357, %v469, %v492
        %v496 = vlaneseq
        %v497 = vshrl.u32 %v496, 7
        %v498 = vsub.s32 0, %v497
        %v499 = vrot.slane %v485, %v498
        %v502 = vsel %vm365, %v494, 0
        %504 = vmatprep.subr.mxu0 0.0
        %505 = vmatpush1.msra.mxu0 %v477
        %506 = vmatprep.subr.mxu0 0.0
        %507 = vmatpush1.msra.mxu0 %v478
        %508 = vmatprep.subr.mxu0 0.0
        %509 = vmatpush1.msra.mxu0 %v479
        %510 = vmatprep.subr.mxu0 0.0
        %511 = vmatpush1.msra.mxu0 %v480
        %512 = vmatprep.subr.mxu0 0.0
        %513 = vmatpush1.msra.mxu0 %v481
        %514 = vmatprep.subr.mxu0 0.0
        %515 = vmatpush1.msra.mxu0 %v482
        %516 = vmatprep.subr.mxu0 0.0
        %517 = vmatpush1.msra.mxu0 %v483
        %518 = vmatprep.subr.mxu0 0.0
        %519 = vmatpush1.msra.mxu0 %v484
        %520 = vmatprep.subr.mxu0 0.0
        %521 = vmatpush1.msra.mxu0 0.0
        %522 = vmatprep.subr.mxu0 0.0
        %523 = vmatpush1.msra.mxu0 0.0
        %524 = vmatprep.subr.mxu0 0.0
        %525 = vmatpush1.msra.mxu0 0.0
        %526 = vmatprep.subr.mxu0 0.0
        %527 = vmatpush1.msra.mxu0 0.0
        %528 = vmatprep.subr.mxu0 0.0
        %529 = vmatpush1.msra.mxu0 0.0
        %530 = vmatprep.subr.mxu0 0.0
        %531 = vmatpush1.msra.mxu0 0.0
        %532 = vmatprep.subr.mxu0 0.0
        %533 = vmatpush1.msra.mxu0 0.0
        %534 = vmatprep.subr.mxu0 0.0
        %535 = vmatpush1.msra.mxu0 0.0
        %536 = vmatprep.subr.mxu0 0.0
        %537 = vmatpush1.msra.mxu0 0.0
        %538 = vmatprep.subr.mxu0 0.0
        %539 = vmatpush1.msra.mxu0 0.0
        %540 = vmatprep.subr.mxu0 0.0
        %541 = vmatpush1.msra.mxu0 0.0
        %542 = vmatprep.subr.mxu0 0.0
        %543 = vmatpush1.msra.mxu0 0.0
        %544 = vmatprep.subr.mxu0 0.0
        %545 = vmatpush1.msra.mxu0 0.0
        %546 = vmatprep.subr.mxu0 0.0
        %547 = vmatpush1.msra.mxu0 0.0
        %548 = vmatprep.subr.mxu0 0.0
        %549 = vmatpush1.msra.mxu0 0.0
        %550 = vmatprep.subr.mxu0 0.0
        %551 = vmatpush1.msra.mxu0 0.0
        %552 = vmatprep.subr.mxu0 0.0
        %553 = vmatpush1.msra.mxu0 0.0
        %554 = vmatprep.subr.mxu0 0.0
        %555 = vmatpush1.msra.mxu0 0.0
        %556 = vmatprep.subr.mxu0 0.0
        %557 = vmatpush1.msra.mxu0 0.0
        %558 = vmatprep.subr.mxu0 0.0
        %559 = vmatpush1.msra.mxu0 0.0
        %560 = vmatprep.subr.mxu0 0.0
        %561 = vmatpush1.msra.mxu0 0.0
        %562 = vmatprep.subr.mxu0 0.0
        %563 = vmatpush1.msra.mxu0 0.0
        %564 = vmatprep.subr.mxu0 0.0
        %565 = vmatpush1.msra.mxu0 0.0
        %566 = vmatprep.subr.mxu0 0.0
        %567 = vmatpush1.msra.mxu0 0.0
        %568 = vmatprep.mubr.f32.mxu0 0.0
        %569 = vmatmul.mubr.f32.gmra.mrb[0].mxu0 %v502
        %v570 = vpop.f32.mrb[0].mxu0
        %v571 = vadd.f32 %v499, %v570
        %v572 = vpop.f32.mrb[0].mxu0
        %573 = vdwg.mxu0
        %v574 = vxor.u32 %v571, 2147483648
        %v575 = vmul.f32 %v574, 1.442695
        %v576 = vpow.pop %v575
        %v577 = vadd.f32 %v576, 1.0
        %v578 = vrcp.pop %v577
        %v579 = vmul.f32 1.0, %v578
        %v580 = vtanh.pop %v571
        %582 = vrot.lane.b32.xlu0 %v489, 32
        %v583 = vpop.permute.xlu0 %582
        %v585 = vmul.f32 %v579, %v583
        %587 = vrot.lane.b32.xlu0 %v580, 64
        %v588 = vpop.permute.xlu0 %587
        %v590 = vmul.f32 %v579, %v588
        %592 = vrot.lane.b32.xlu0 %v590, 32
        %v593 = vpop.permute.xlu0 %592
        %v595 = vadd.f32 %v585, %v593
        %v596 = vtanh.pop %v595
        %598 = vrot.lane.b32.xlu0 %v596, 64
        %v599 = vpop.permute.xlu0 %598
        %v601 = vmul.f32 %v579, %v599
        %603 = vrot.lane.b32.xlu0 %v601, 32
        %v604 = vpop.permute.xlu0 %603
        %606 = vst.msk [vmem:[%s486] sm:$0xff] %vm357, %v604
        %608 = vrot.lane.b32.xlu0 %v595, 96
        %v609 = vpop.permute.xlu0 %608
        %611 = vst.msk [vmem:[%s488] sm:$0xff] %vm357, %v609
        // Predicated region
        $region57: #{tpu_custom_call.1} parent=39 // pred_check
          %p612 = pneg %p145
        $region58: #{tpu_custom_call.1} parent=39 // pred_check_branch
          %614 = sbr.rel (%p612) target = $region60
        $region59: #{tpu_custom_call.1} parent=39 // pred_region
          %s616 = ssub.s32 256, 256
          %617 = vsyncadd [#allocation6], %s616
          %s618 = sshll.u32 [#allocation10], 4
          %s619 = int_to_ptr.vmem [resolvable:$true] %s618
          %624 = dma.vmem_to_hbm [thread:$0]  %s619, 256, %s6, [#allocation6], 128, 128, 8
        $region60: #{tpu_custom_call.1} parent=39 // pred_fallthru
          _
        // Predicated region
        $region61: #{tpu_custom_call.1} parent=39 // pred_check
          %p625 = pneg %p166
        $region62: #{tpu_custom_call.1} parent=39 // pred_check_branch
          %627 = sbr.rel (%p625) target = $region64
        $region63: #{tpu_custom_call.1} parent=39 // pred_region
          %s629 = ssub.s32 256, 256
          %630 = vsyncadd [#allocation12], %s629
          %s631 = sshll.u32 [#allocation11], 4
          %s632 = int_to_ptr.vmem [resolvable:$true] %s631
          %637 = dma.vmem_to_hbm [thread:$0]  %s632, 256, %s7, [#allocation12], 128, 128, 8
        $region64: #{tpu_custom_call.1} parent=39 // pred_fallthru
          _
        // Predicated region
        $region65: #{tpu_custom_call.1} parent=39 // pred_check
          %p638 = pneg %p145
        $region66: #{tpu_custom_call.1} parent=39 // pred_check_branch
          %640 = sbr.rel (%p638) target = $region68
        $region67: #{tpu_custom_call.1} parent=39 // pred_region
          %641 = dma.done [#allocation6], 256
        $region68: #{tpu_custom_call.1} parent=39 // pred_fallthru
          _
        // Predicated region
        $region69: #{tpu_custom_call.1} parent=39 // pred_check
          %p642 = pneg %p166
        $region70: #{tpu_custom_call.1} parent=39 // pred_check_branch
          %644 = sbr.rel (%p642) target = $region72
        $region71: #{tpu_custom_call.1} parent=39 // pred_region
          %645 = dma.done [#allocation12], 256
        $region72: #{tpu_custom_call.1} parent=39 // pred_fallthru
          _
      $region40: #{tpu_custom_call.1} parent=5 // pred_fallthru
        _
      %p646 = scmp.le.s32.totalorder 2, %s22
      // Predicated region
      $region73: #{tpu_custom_call.1} parent=5 // pred_check
        %p647 = pneg %p646
      $region74: #{tpu_custom_call.1} parent=5 // pred_check_branch
        %649 = sbr.rel (%p647) target = $region76
      $region75: #{tpu_custom_call.1} parent=5 // pred_region
        %s650 = ssub.s32 %s22, 2
      $region76: #{tpu_custom_call.1} parent=5 // pred_fallthru
        _
    $region6: #{tpu_custom_call.1} parent=1 // loop_footer
      %s26 = sadd.s32 1, %s22
    $region7: #{tpu_custom_call.1} parent=1 // loop_footer_branch
      %21 = sbr.rel target = $region3
    $region8: #{tpu_custom_call.1} parent=1 // loop_exit
      _
    %651 = vsyncpa [#allocation5], 1
    %s652 = scalar_lea.sflag [#allocation5], 1
    %653 = vsyncpa %s652, 1
    %654 = vsyncpa [#allocation8], 1
    %655 = vsyncpa [#allocation6], 1
    %s656 = scalar_lea.sflag [#allocation6], 1
    %657 = vsyncpa %s656, 1
    %658 = vsyncpa [#allocation12], 1

</llo_original>
